<compile_context>
chip_gen: v7x
topology: tpu7x:2x2x1
jax: 0.10.0
libtpu: 0.0.40
codegen_flags: <defaults>
</compile_context>

<pallas_src>
import functools

import jax
import jax.numpy as jnp
from jax.experimental import pallas as pl
from jax.experimental.pallas import tpu as pltpu


# ---------------------------------------------------------------------------
# helpers
# ---------------------------------------------------------------------------
def _round_up(x: int, m: int) -> int:
    return (x + m - 1) // m * m


def _feature_tile(n: int) -> int:
    # Whole dim as one tile whenever it is reasonably small (drops grid axes);
    # otherwise prefer large 128-aligned tiles.
    if n <= 1024:
        return n
    for t in (512, 256, 128):
        if n % t == 0:
            return t
    return n


# ---------------------------------------------------------------------------
# fused whole-MLP kernel (main path)
# ---------------------------------------------------------------------------
def _fused_mlp_kernel(x_ref, w1_ref, b1_ref, w2_ref, b2_ref,
                      wg_ref, bg_ref, wb_ref, bb_ref,
                      gamma_ref, beta_ref):
    # layer 1: relu(x @ w1 + b1)   (bf16 x bf16 -> f32 accumulate on the MXU)
    h = jnp.dot(x_ref[...], w1_ref[...], preferred_element_type=jnp.float32)
    h = jnp.maximum(h + b1_ref[...], 0.0)
    # layer 2: relu(h @ w2 + b2); h stays f32 in VMEM, cheap cast at the dot.
    h = jnp.dot(h.astype(w2_ref.dtype), w2_ref[...],
                preferred_element_type=jnp.float32)
    h = jnp.maximum(h + b2_ref[...], 0.0)
    hc = h.astype(wg_ref.dtype)
    # heads: two separate lane-dense outputs (no padded 2*dim_p slab).
    gamma_ref[...] = (jnp.dot(hc, wg_ref[...],
                              preferred_element_type=jnp.float32)
                      + bg_ref[...]).astype(gamma_ref.dtype)
    beta_ref[...] = (jnp.dot(hc, wb_ref[...],
                             preferred_element_type=jnp.float32)
                     + bb_ref[...]).astype(beta_ref.dtype)


def _fused_mlp(x_p, params, tm):
    M, dim_p = x_p.shape
    grid = (M // tm,)

    full = lambda i: (0, 0)   # resident blocks: same block every grid step
    act = lambda i: (i, 0)
    wspec = pl.BlockSpec((dim_p, dim_p), full)
    bspec = pl.BlockSpec((1, dim_p), full)

    gamma, beta = pl.pallas_call(
        _fused_mlp_kernel,
        out_shape=[jax.ShapeDtypeStruct((M, dim_p), jnp.float32),
                   jax.ShapeDtypeStruct((M, dim_p), jnp.float32)],
        grid_spec=pltpu.PrefetchScalarGridSpec(
            num_scalar_prefetch=0,
            grid=grid,
            in_specs=[
                pl.BlockSpec((tm, dim_p), act),
                wspec, bspec, wspec, bspec, wspec, bspec, wspec, bspec,
            ],
            out_specs=[pl.BlockSpec((tm, dim_p), act),
                       pl.BlockSpec((tm, dim_p), act)],
        ),
        compiler_params=pltpu.CompilerParams(
            dimension_semantics=("parallel",),
            vmem_limit_bytes=32 * 1024 * 1024),
    )(x_p, params["w1"], params["b1"], params["w2"], params["b2"],
      params["wg"], params["bg"], params["wb"], params["bb"])
    return gamma, beta


def _fused_vmem_bytes(tm: int, dim_p: int, itemsize: int = 2) -> int:
    # Conservative estimate: weights/biases counted double-buffered, x
    # double-buffered, two f32 outputs double-buffered, plus f32 temporaries.
    w = 2 * 4 * dim_p * dim_p * itemsize
    b = 2 * 4 * dim_p * 4
    x = 2 * tm * dim_p * itemsize
    o = 2 * 2 * tm * dim_p * 4
    tmp = 4 * tm * dim_p * 4
    return w + b + x + o + tmp


# ---------------------------------------------------------------------------
# tiled per-layer fallback (large dims where weight residency won't fit VMEM)
# ---------------------------------------------------------------------------
def _linear_kernel_nok(x_ref, w_ref, b_ref, o_ref, *, relu):
    y = jnp.dot(x_ref[...], w_ref[...],
                preferred_element_type=jnp.float32) + b_ref[...]
    if relu:
        y = jnp.maximum(y, 0.0)
    o_ref[...] = y.astype(o_ref.dtype)


def _linear_kernel_acc(x_ref, w_ref, b_ref, o_ref, acc_ref, *, relu):
    k = pl.program_id(2)

    @pl.when(k == 0)
    def _():
        acc_ref[...] = jnp.zeros_like(acc_ref)

    acc_ref[...] += jnp.dot(x_ref[...], w_ref[...],
                            preferred_element_type=jnp.float32)

    @pl.when(k == pl.num_programs(2) - 1)
    def _():
        y = acc_ref[...] + b_ref[...]
        if relu:
            y = jnp.maximum(y, 0.0)
        o_ref[...] = y.astype(o_ref.dtype)


def _pallas_linear(x, w, b, *, tm, relu, out_dtype):
    """y = [relu](x @ w + b); x: [M, K], w: [K, N], b: [1, N]."""
    M, K = x.shape
    K2, N = w.shape
    assert K == K2 and b.shape == (1, N)
    assert M % tm == 0 and M % 8 == 0 and K % 128 == 0 and N % 128 == 0

    tn = _feature_tile(N)
    tk = _feature_tile(K)

    if tk == K:
        # K fits one tile: no K grid axis, no accumulator scratch.
        return pl.pallas_call(
            functools.partial(_linear_kernel_nok, relu=relu),
            out_shape=jax.ShapeDtypeStruct((M, N), out_dtype),
            grid_spec=pltpu.PrefetchScalarGridSpec(
                num_scalar_prefetch=0,
                grid=(M // tm, N // tn),
                in_specs=[
                    pl.BlockSpec((tm, K), lambda i, j: (i, 0)),
                    pl.BlockSpec((K, tn), lambda i, j: (0, j)),
                    pl.BlockSpec((1, tn), lambda i, j: (0, j)),
                ],
                out_specs=pl.BlockSpec((tm, tn), lambda i, j: (i, j)),
            ),
            compiler_params=pltpu.CompilerParams(
                dimension_semantics=("parallel", "parallel"),
                vmem_limit_bytes=32 * 1024 * 1024),
        )(x, w, b)

    return pl.pallas_call(
        functools.partial(_linear_kernel_acc, relu=relu),
        out_shape=jax.ShapeDtypeStruct((M, N), out_dtype),
        grid_spec=pltpu.PrefetchScalarGridSpec(
            num_scalar_prefetch=0,
            grid=(M // tm, N // tn, K // tk),
            in_specs=[
                pl.BlockSpec((tm, tk), lambda i, j, k: (i, k)),
                pl.BlockSpec((tk, tn), lambda i, j, k: (k, j)),
                pl.BlockSpec((1, tn), lambda i, j, k: (0, j)),
            ],
            out_specs=pl.BlockSpec((tm, tn), lambda i, j, k: (i, j)),
            scratch_shapes=[pltpu.VMEM((tm, tn), jnp.float32)],
        ),
        compiler_params=pltpu.CompilerParams(
            dimension_semantics=("parallel", "parallel", "arbitrary"),
            vmem_limit_bytes=32 * 1024 * 1024),
    )(x, w, b)


# ---------------------------------------------------------------------------
# parameter prep (one-time, outside the hot path)
# ---------------------------------------------------------------------------
def prepare_mlp_params(w1, b1, w2, b2, wg, bg, wb, bb,
                       *, compute_dtype=jnp.bfloat16):
    """Pack PyTorch-layout (out, in) weights into padded, pre-transposed
    [in_p, out_p] bf16 panels and f32 (1, out_p) biases."""
    dim = w1.shape[1]
    dim_p = _round_up(dim, 128)
    pad = dim_p - dim

    def pad_w(w):  # (out, in) -> (in_p, out_p), compute dtype
        return jnp.pad(w.T.astype(compute_dtype), ((0, pad), (0, pad)))

    def pad_b(b):  # (out,) -> (1, out_p), f32
        return jnp.pad(b.astype(jnp.float32), (0, pad)).reshape(1, dim_p)

    return dict(
        dim=dim, dim_p=dim_p, compute_dtype=compute_dtype,
        w1=pad_w(w1), b1=pad_b(b1),
        w2=pad_w(w2), b2=pad_b(b2),
        wg=pad_w(wg), bg=pad_b(bg),
        wb=pad_w(wb), bb=pad_b(bb),
    )


# ---------------------------------------------------------------------------
# MLP forward
# ---------------------------------------------------------------------------
def mlp_forward(x, params, *, max_fused_vmem_bytes=20 * 1024 * 1024):
    dim, dim_p = params["dim"], params["dim_p"]
    cdt = params["compute_dtype"]

    B = x.shape[0]
    x = x.reshape(B, -1)                       # mirrors x.view(b, c)
    assert x.shape[1] == dim

    # Batch only needs sublane (8) alignment; never over-pad to 128/256 unless
    # the batch is large enough to need multiple row tiles.
    B_p = _round_up(B, 8)
    if B_p > 512:
        tm = 256
        B_p = _round_up(B, tm)
    else:
        tm = B_p

    x_p = jnp.pad(x.astype(cdt), ((0, B_p - B), (0, dim_p - dim)))

    if _fused_vmem_bytes(tm, dim_p) <= max_fused_vmem_bytes:
        # Fast path: one kernel launch, resident weights, h never leaves VMEM.
        gamma_p, beta_p = _fused_mlp(x_p, params, tm)
    else:
        # Weight residency would not fit VMEM (v7x: 64 MiB phys / 32 MiB
        # scoped): per-layer tiled matmuls.
        h = _pallas_linear(x_p, params["w1"], params["b1"],
                           tm=tm, relu=True, out_dtype=cdt)
        h = _pallas_linear(h, params["w2"], params["b2"],
                           tm=tm, relu=True, out_dtype=cdt)
        gamma_p = _pallas_linear(h, params["wg"], params["bg"],
                                 tm=tm, relu=False, out_dtype=jnp.float32)
        beta_p = _pallas_linear(h, params["wb"], params["bb"],
                                tm=tm, relu=False, out_dtype=jnp.float32)

    if B_p == B and dim_p == dim:
        return gamma_p, beta_p
    return gamma_p[:B, :dim], beta_p[:B, :dim]


# ---------------------------------------------------------------------------
# reference & self-test
# ---------------------------------------------------------------------------
def _reference(x, w1, b1, w2, b2, wg, bg, wb, bb):
    x = x.reshape(x.shape[0], -1)
    h = jax.nn.relu(x @ w1.T + b1)
    h = jax.nn.relu(h @ w2.T + b2)
    return h @ wg.T + bg, h @ wb.T + bb


def _make_case(key, B, dim, x_shape=None):
    keys = jax.random.split(key, 9)
    bound = 1.0 / (dim ** 0.5)

    def u(k, shape):
        return jax.random.uniform(k, shape, jnp.float32, -bound, bound)

    shape = x_shape if x_shape is not None else (B, dim)
    x = jax.random.normal(keys[0], shape, jnp.float32)
    weights = (u(keys[1], (dim, dim)), u(keys[2], (dim,)),
               u(keys[3], (dim, dim)), u(keys[4], (dim,)),
               u(keys[5], (dim, dim)), u(keys[6], (dim,)),
               u(keys[7], (dim, dim)), u(keys[8], (dim,)))
    return x, weights


def _run_case(key, B, dim, *, x_shape=None,
              max_fused_vmem_bytes=20 * 1024 * 1024, atol=5e-2, rtol=5e-2):
    x, weights = _make_case(key, B, dim, x_shape)
    params = prepare_mlp_params(*weights)
    gamma, beta = mlp_forward(x, params,
                              max_fused_vmem_bytes=max_fused_vmem_bytes)
    jax.block_until_ready((gamma, beta))

    ref_g, ref_b = _reference(x, *weights)
    assert gamma.shape == (B, dim) and beta.shape == (B, dim)
    assert jnp.allclose(gamma, ref_g, atol=atol, rtol=rtol), "gamma mismatch"
    assert jnp.allclose(beta, ref_b, atol=atol, rtol=rtol), "beta mismatch"


if __name__ == "__main__":
    key = jax.random.PRNGKey(0)
    k1, k2, k3 = jax.random.split(key, 3)

    # Typical style-code usage: x arrives as [B, C, 1, 1]; view(b, c) -> [2, 32].
    _run_case(k1, B=2, dim=32, x_shape=(2, 32, 1, 1))
    # Fused path with real padding (batch 12 -> 16 rows, dim 320 -> 384 lanes).
    _run_case(k2, B=12, dim=320)
    # Force the tiled fallback once so both code paths are validated.
    _run_case(k3, B=4, dim=32, max_fused_vmem_bytes=0)

    print("KERNEL_OK")
</pallas_src>

<mosaic_0001>
module attributes {stable_mosaic.version = 11 : i64} {
  func.func @_fused_mlp_kernel(%arg0: i32, %arg1: memref<8x128xbf16, #tpu.memory_space<vmem>>, %arg2: memref<128x128xbf16, #tpu.memory_space<vmem>>, %arg3: memref<1x128xf32, #tpu.memory_space<vmem>>, %arg4: memref<128x128xbf16, #tpu.memory_space<vmem>>, %arg5: memref<1x128xf32, #tpu.memory_space<vmem>>, %arg6: memref<128x128xbf16, #tpu.memory_space<vmem>>, %arg7: memref<1x128xf32, #tpu.memory_space<vmem>>, %arg8: memref<128x128xbf16, #tpu.memory_space<vmem>>, %arg9: memref<1x128xf32, #tpu.memory_space<vmem>>, %arg10: memref<8x128xf32, #tpu.memory_space<vmem>>, %arg11: memref<8x128xf32, #tpu.memory_space<vmem>>) attributes {dimension_semantics = [#tpu.dimension_semantics<parallel>], iteration_bounds = array<i64: 1>, scalar_prefetch = 0 : i64, scratch_operands = 0 : i64, tpu.core_type = #tpu.core_type<tc>, window_params = [{transform_indices = @transform_0, window_bounds = array<i64: 8, 128>}, {pipeline_mode = #tpu.pipeline_mode<synchronous>, transform_indices = @transform_1, window_bounds = array<i64: 128, 128>}, {pipeline_mode = #tpu.pipeline_mode<synchronous>, transform_indices = @transform_2, window_bounds = array<i64: 1, 128>}, {pipeline_mode = #tpu.pipeline_mode<synchronous>, transform_indices = @transform_3, window_bounds = array<i64: 128, 128>}, {pipeline_mode = #tpu.pipeline_mode<synchronous>, transform_indices = @transform_4, window_bounds = array<i64: 1, 128>}, {pipeline_mode = #tpu.pipeline_mode<synchronous>, transform_indices = @transform_5, window_bounds = array<i64: 128, 128>}, {pipeline_mode = #tpu.pipeline_mode<synchronous>, transform_indices = @transform_6, window_bounds = array<i64: 1, 128>}, {pipeline_mode = #tpu.pipeline_mode<synchronous>, transform_indices = @transform_7, window_bounds = array<i64: 128, 128>}, {pipeline_mode = #tpu.pipeline_mode<synchronous>, transform_indices = @transform_8, window_bounds = array<i64: 1, 128>}, {transform_indices = @transform_9, window_bounds = array<i64: 8, 128>}, {transform_indices = @transform_10, window_bounds = array<i64: 8, 128>}]} {
    %c0 = arith.constant 0 : index
    %c0_0 = arith.constant 0 : index
    %0 = vector.load %arg1[%c0, %c0_0] : memref<8x128xbf16, #tpu.memory_space<vmem>>, vector<8x128xbf16>
    %c0_1 = arith.constant 0 : index
    %c0_2 = arith.constant 0 : index
    %1 = vector.load %arg2[%c0_1, %c0_2] : memref<128x128xbf16, #tpu.memory_space<vmem>>, vector<128x128xbf16>
    %cst = arith.constant dense<0.000000e+00> : vector<8x128xf32>
    %2 = tpu.matmul %0, %1, %cst {dimension_numbers = #tpu.dot_dimension_numbers<[1], [0], [0], [1], [0, 0, 1, 1], [], []>} : vector<8x128xbf16>, vector<128x128xbf16>, vector<8x128xf32> -> vector<8x128xf32>
    %c0_3 = arith.constant 0 : index
    %c0_4 = arith.constant 0 : index
    %3 = vector.load %arg3[%c0_3, %c0_4] : memref<1x128xf32, #tpu.memory_space<vmem>>, vector<1x128xf32>
    %4 = vector.broadcast %3 : vector<1x128xf32> to vector<8x128xf32>
    %5 = arith.addf %2, %4 : vector<8x128xf32>
    %cst_5 = arith.constant 0.000000e+00 : f32
    %6 = vector.broadcast %cst_5 : f32 to vector<8x128xf32>
    %7 = arith.maximumf %5, %6 : vector<8x128xf32>
    %8 = arith.truncf %7 : vector<8x128xf32> to vector<8x128xbf16>
    %c0_6 = arith.constant 0 : index
    %c0_7 = arith.constant 0 : index
    %9 = vector.load %arg4[%c0_6, %c0_7] : memref<128x128xbf16, #tpu.memory_space<vmem>>, vector<128x128xbf16>
    %cst_8 = arith.constant dense<0.000000e+00> : vector<8x128xf32>
    %10 = tpu.matmul %8, %9, %cst_8 {dimension_numbers = #tpu.dot_dimension_numbers<[1], [0], [0], [1], [0, 0, 1, 1], [], []>} : vector<8x128xbf16>, vector<128x128xbf16>, vector<8x128xf32> -> vector<8x128xf32>
    %c0_9 = arith.constant 0 : index
    %c0_10 = arith.constant 0 : index
    %11 = vector.load %arg5[%c0_9, %c0_10] : memref<1x128xf32, #tpu.memory_space<vmem>>, vector<1x128xf32>
    %12 = vector.broadcast %11 : vector<1x128xf32> to vector<8x128xf32>
    %13 = arith.addf %10, %12 : vector<8x128xf32>
    %cst_11 = arith.constant 0.000000e+00 : f32
    %14 = vector.broadcast %cst_11 : f32 to vector<8x128xf32>
    %15 = arith.maximumf %13, %14 : vector<8x128xf32>
    %16 = arith.truncf %15 : vector<8x128xf32> to vector<8x128xbf16>
    %c0_12 = arith.constant 0 : index
    %c0_13 = arith.constant 0 : index
    %17 = vector.load %arg6[%c0_12, %c0_13] : memref<128x128xbf16, #tpu.memory_space<vmem>>, vector<128x128xbf16>
    %cst_14 = arith.constant dense<0.000000e+00> : vector<8x128xf32>
    %18 = tpu.matmul %16, %17, %cst_14 {dimension_numbers = #tpu.dot_dimension_numbers<[1], [0], [0], [1], [0, 0, 1, 1], [], []>} : vector<8x128xbf16>, vector<128x128xbf16>, vector<8x128xf32> -> vector<8x128xf32>
    %c0_15 = arith.constant 0 : index
    %c0_16 = arith.constant 0 : index
    %19 = vector.load %arg7[%c0_15, %c0_16] : memref<1x128xf32, #tpu.memory_space<vmem>>, vector<1x128xf32>
    %20 = vector.broadcast %19 : vector<1x128xf32> to vector<8x128xf32>
    %21 = arith.addf %18, %20 : vector<8x128xf32>
    %c0_17 = arith.constant 0 : index
    %c0_18 = arith.constant 0 : index
    %22 = vector.load %arg10[%c0_17, %c0_18] : memref<8x128xf32, #tpu.memory_space<vmem>>, vector<8x128xf32>
    tpu.vector_store %arg10[%c0_17, %c0_18], %21 {strides = array<i32>} : memref<8x128xf32, #tpu.memory_space<vmem>>, vector<8x128xf32>,
    %c0_19 = arith.constant 0 : index
    %c0_20 = arith.constant 0 : index
    %23 = vector.load %arg8[%c0_19, %c0_20] : memref<128x128xbf16, #tpu.memory_space<vmem>>, vector<128x128xbf16>
    %cst_21 = arith.constant dense<0.000000e+00> : vector<8x128xf32>
    %24 = tpu.matmul %16, %23, %cst_21 {dimension_numbers = #tpu.dot_dimension_numbers<[1], [0], [0], [1], [0, 0, 1, 1], [], []>} : vector<8x128xbf16>, vector<128x128xbf16>, vector<8x128xf32> -> vector<8x128xf32>
    %c0_22 = arith.constant 0 : index
    %c0_23 = arith.constant 0 : index
    %25 = vector.load %arg9[%c0_22, %c0_23] : memref<1x128xf32, #tpu.memory_space<vmem>>, vector<1x128xf32>
    %26 = vector.broadcast %25 : vector<1x128xf32> to vector<8x128xf32>
    %27 = arith.addf %24, %26 : vector<8x128xf32>
    %c0_24 = arith.constant 0 : index
    %c0_25 = arith.constant 0 : index
    %28 = vector.load %arg11[%c0_24, %c0_25] : memref<8x128xf32, #tpu.memory_space<vmem>>, vector<8x128xf32>
    tpu.vector_store %arg11[%c0_24, %c0_25], %27 {strides = array<i32>} : memref<8x128xf32, #tpu.memory_space<vmem>>, vector<8x128xf32>,
    return
  }
  func.func @transform_0(%arg0: i32) -> (i32, i32) {
    %c0_i32 = arith.constant 0 : i32
    %c0_i32_0 = arith.constant 0 : i32
    return %arg0, %c0_i32 : i32, i32
  }
  func.func @transform_1(%arg0: i32) -> (i32, i32) {
    %c0_i32 = arith.constant 0 : i32
    %c0_i32_0 = arith.constant 0 : i32
    %c0_i32_1 = arith.constant 0 : i32
    return %c0_i32, %c0_i32_0 : i32, i32
  }
  func.func @transform_2(%arg0: i32) -> (i32, i32) {
    %c0_i32 = arith.constant 0 : i32
    %c0_i32_0 = arith.constant 0 : i32
    %c0_i32_1 = arith.constant 0 : i32
    return %c0_i32, %c0_i32_0 : i32, i32
  }
  func.func @transform_3(%arg0: i32) -> (i32, i32) {
    %c0_i32 = arith.constant 0 : i32
    %c0_i32_0 = arith.constant 0 : i32
    %c0_i32_1 = arith.constant 0 : i32
    return %c0_i32, %c0_i32_0 : i32, i32
  }
  func.func @transform_4(%arg0: i32) -> (i32, i32) {
    %c0_i32 = arith.constant 0 : i32
    %c0_i32_0 = arith.constant 0 : i32
    %c0_i32_1 = arith.constant 0 : i32
    return %c0_i32, %c0_i32_0 : i32, i32
  }
  func.func @transform_5(%arg0: i32) -> (i32, i32) {
    %c0_i32 = arith.constant 0 : i32
    %c0_i32_0 = arith.constant 0 : i32
    %c0_i32_1 = arith.constant 0 : i32
    return %c0_i32, %c0_i32_0 : i32, i32
  }
  func.func @transform_6(%arg0: i32) -> (i32, i32) {
    %c0_i32 = arith.constant 0 : i32
    %c0_i32_0 = arith.constant 0 : i32
    %c0_i32_1 = arith.constant 0 : i32
    return %c0_i32, %c0_i32_0 : i32, i32
  }
  func.func @transform_7(%arg0: i32) -> (i32, i32) {
    %c0_i32 = arith.constant 0 : i32
    %c0_i32_0 = arith.constant 0 : i32
    %c0_i32_1 = arith.constant 0 : i32
    return %c0_i32, %c0_i32_0 : i32, i32
  }
  func.func @transform_8(%arg0: i32) -> (i32, i32) {
    %c0_i32 = arith.constant 0 : i32
    %c0_i32_0 = arith.constant 0 : i32
    %c0_i32_1 = arith.constant 0 : i32
    return %c0_i32, %c0_i32_0 : i32, i32
  }
  func.func @transform_9(%arg0: i32) -> (i32, i32) {
    %c0_i32 = arith.constant 0 : i32
    %c0_i32_0 = arith.constant 0 : i32
    return %arg0, %c0_i32 : i32, i32
  }
  func.func @transform_10(%arg0: i32) -> (i32, i32) {
    %c0_i32 = arith.constant 0 : i32
    %c0_i32_0 = arith.constant 0 : i32
    return %arg0, %c0_i32 : i32, i32
  }
}

</mosaic_0001>

<llo_original>
// kernel: tpu_custom_call.1
$region0: #{tpu_custom_call.1}
  #allocation0 [shape = 'u32[]', space=smem, size = 0x4, offset = 0x4, fixed_abs, tag = 'smem constant byte address 0x4 - core index']
  #allocation1 [shape = 'u32[144,128]{1,0:T(1,128)}', space=vmem, size = 0x12000, scoped, tag = 'internal scratch']
  %s0 = inlined_call_operand.hbm [shape: bf16[8,128], index: 0, kind: input, shape index: {}]
  %s1 = inlined_call_operand.hbm [shape: bf16[128,128], index: 1, kind: input, shape index: {}]
  %s2 = inlined_call_operand.vmem [shape: f32[1,128], index: 2, kind: input, shape index: {}]
  %s3 = inlined_call_operand.hbm [shape: bf16[128,128], index: 3, kind: input, shape index: {}]
  %s4 = inlined_call_operand.vmem [shape: f32[1,128], index: 4, kind: input, shape index: {}]
  %s5 = inlined_call_operand.hbm [shape: bf16[128,128], index: 5, kind: input, shape index: {}]
  %s6 = inlined_call_operand.vmem [shape: f32[1,128], index: 6, kind: input, shape index: {}]
  %s7 = inlined_call_operand.hbm [shape: bf16[128,128], index: 7, kind: input, shape index: {}]
  %s8 = inlined_call_operand.vmem [shape: f32[1,128], index: 8, kind: input, shape index: {}]
  %s9 = inlined_call_operand.hbm [shape: f32[8,128], index: 9, kind: output, shape index: {0}]
  %s10 = inlined_call_operand.hbm [shape: f32[8,128], index: 10, kind: output, shape index: {1}]
  %11 = xla_tuple %s9, %s10
  %s12 = sld [smem:[#allocation0]]
  $region74: #{tpu_custom_call.1} parent=0
    _
  %s14 = ssub.s32 1, %s12
  %s15 = scalar_select 0, %s14, %s12
  $region1: #{tpu_custom_call.1} parent=0
    #allocation2 [shape = 'u8[2048]{0}', space=vmem, size = 0x800, scoped, tag = 'input window, operand 0, single buffered']
    #allocation3 [shape = 's32[1]{0}', space=sflag, size = 0x4, scoped, tag = 'scoped memory for tpu_custom_call.1']
    #allocation4 [shape = 's32[1]{0}', space=sflag, size = 0x4, scoped, tag = 'scoped memory for tpu_custom_call.1']
    #allocation5 [shape = 'u8[32768]{0}', space=vmem, size = 0x8000, scoped, tag = 'input window, operand 1, single buffered']
    #allocation6 [shape = 's32[1]{0}', space=sflag, size = 0x4, scoped, tag = 'scoped memory for tpu_custom_call.1']
    #allocation7 [shape = 'u8[32768]{0}', space=vmem, size = 0x8000, scoped, tag = 'input window, operand 3, single buffered']
    #allocation8 [shape = 'u8[32768]{0}', space=vmem, size = 0x8000, scoped, tag = 'input window, operand 5, single buffered']
    #allocation9 [shape = 's32[1]{0}', space=sflag, size = 0x4, scoped, tag = 'scoped memory for tpu_custom_call.1']
    #allocation10 [shape = 'u8[32768]{0}', space=vmem, size = 0x8000, scoped, tag = 'input window, operand 7, single buffered']
    #allocation11 [shape = 'u8[4096]{0}', space=vmem, size = 0x1000, scoped, tag = 'output window, operand 0, single buffered']
    #allocation12 [shape = 'u8[4096]{0}', space=vmem, size = 0x1000, scoped, tag = 'output window, operand 1, single buffered']
    #allocation13 [shape = 's32[1]{0}', space=sflag, size = 0x4, scoped, tag = 'scoped memory for tpu_custom_call.1']
    %16 = vsyncpa [#allocation3], 0
    %17 = vsyncpa [#allocation6], 0
    %18 = vsyncpa [#allocation9], 0
    %19 = vsyncpa [#allocation4], 0
    %20 = vsyncpa [#allocation13], 0
    // Predicated region
    $region2: #{tpu_custom_call.1} parent=1 // pred_check
      _
    $region3: #{tpu_custom_call.1} parent=1 // pred_check_branch
      %22 = sbr.rel (0) target = $region5
    $region4: #{tpu_custom_call.1} parent=1 // pred_region
      %s24 = ssub.s32 64, 64
      %25 = vsyncadd [#allocation3], %s24
      %s27 = sshll.u32 [#allocation2], 4
      %s28 = int_to_ptr.vmem [resolvable:$true] %s27
      %30 = dma.hbm_to_vmem [thread:$0]  %s0, 64, %s28, [#allocation3]
    $region5: #{tpu_custom_call.1} parent=1 // pred_fallthru
      _
    // Predicated region
    $region6: #{tpu_custom_call.1} parent=1 // pred_check
      _
    $region7: #{tpu_custom_call.1} parent=1 // pred_check_branch
      %32 = sbr.rel (0) target = $region9
    $region8: #{tpu_custom_call.1} parent=1 // pred_region
      %s34 = ssub.s32 1024, 1024
      %35 = vsyncadd [#allocation6], %s34
      %s36 = sshll.u32 [#allocation5], 4
      %s37 = int_to_ptr.vmem [resolvable:$true] %s36
      %42 = dma.hbm_to_vmem [thread:$0]  %s1, 1024, %s37, [#allocation6], 64, 64, 4
    $region9: #{tpu_custom_call.1} parent=1 // pred_fallthru
      _
    // Predicated region
    $region10: #{tpu_custom_call.1} parent=1 // pred_check
      _
    $region11: #{tpu_custom_call.1} parent=1 // pred_check_branch
      %44 = sbr.rel (0) target = $region13
    $region12: #{tpu_custom_call.1} parent=1 // pred_region
      _
    $region13: #{tpu_custom_call.1} parent=1 // pred_fallthru
      _
    // Predicated region
    $region14: #{tpu_custom_call.1} parent=1 // pred_check
      _
    $region15: #{tpu_custom_call.1} parent=1 // pred_check_branch
      %46 = sbr.rel (0) target = $region17
    $region16: #{tpu_custom_call.1} parent=1 // pred_region
      %s48 = ssub.s32 1024, 1024
      %49 = vsyncadd [#allocation6], %s48
      %s50 = sshll.u32 [#allocation7], 4
      %s51 = int_to_ptr.vmem [resolvable:$true] %s50
      %56 = dma.hbm_to_vmem [thread:$0]  %s3, 1024, %s51, [#allocation6], 64, 64, 4
    $region17: #{tpu_custom_call.1} parent=1 // pred_fallthru
      _
    // Predicated region
    $region18: #{tpu_custom_call.1} parent=1 // pred_check
      _
    $region19: #{tpu_custom_call.1} parent=1 // pred_check_branch
      %58 = sbr.rel (0) target = $region21
    $region20: #{tpu_custom_call.1} parent=1 // pred_region
      _
    $region21: #{tpu_custom_call.1} parent=1 // pred_fallthru
      _
    // Predicated region
    $region22: #{tpu_custom_call.1} parent=1 // pred_check
      _
    $region23: #{tpu_custom_call.1} parent=1 // pred_check_branch
      %60 = sbr.rel (0) target = $region25
    $region24: #{tpu_custom_call.1} parent=1 // pred_region
      %s62 = ssub.s32 1024, 1024
      %63 = vsyncadd [#allocation9], %s62
      %s64 = sshll.u32 [#allocation8], 4
      %s65 = int_to_ptr.vmem [resolvable:$true] %s64
      %70 = dma.hbm_to_vmem [thread:$0]  %s5, 1024, %s65, [#allocation9], 64, 64, 4
    $region25: #{tpu_custom_call.1} parent=1 // pred_fallthru
      _
    // Predicated region
    $region26: #{tpu_custom_call.1} parent=1 // pred_check
      _
    $region27: #{tpu_custom_call.1} parent=1 // pred_check_branch
      %72 = sbr.rel (0) target = $region29
    $region28: #{tpu_custom_call.1} parent=1 // pred_region
      _
    $region29: #{tpu_custom_call.1} parent=1 // pred_fallthru
      _
    // Predicated region
    $region30: #{tpu_custom_call.1} parent=1 // pred_check
      _
    $region31: #{tpu_custom_call.1} parent=1 // pred_check_branch
      %74 = sbr.rel (0) target = $region33
    $region32: #{tpu_custom_call.1} parent=1 // pred_region
      %s76 = ssub.s32 1024, 1024
      %77 = vsyncadd [#allocation9], %s76
      %s78 = sshll.u32 [#allocation10], 4
      %s79 = int_to_ptr.vmem [resolvable:$true] %s78
      %84 = dma.hbm_to_vmem [thread:$0]  %s7, 1024, %s79, [#allocation9], 64, 64, 4
    $region33: #{tpu_custom_call.1} parent=1 // pred_fallthru
      _
    // Predicated region
    $region34: #{tpu_custom_call.1} parent=1 // pred_check
      _
    $region35: #{tpu_custom_call.1} parent=1 // pred_check_branch
      %86 = sbr.rel (0) target = $region37
    $region36: #{tpu_custom_call.1} parent=1 // pred_region
      _
    $region37: #{tpu_custom_call.1} parent=1 // pred_fallthru
      _
    // Predicated region
    $region38: #{tpu_custom_call.1} parent=1 // pred_check
      _
    $region39: #{tpu_custom_call.1} parent=1 // pred_check_branch
      %88 = sbr.rel (0) target = $region41
    $region40: #{tpu_custom_call.1} parent=1 // pred_region
      %89 = dma.done [#allocation3], 64
    $region41: #{tpu_custom_call.1} parent=1 // pred_fallthru
      _
    // Predicated region
    $region42: #{tpu_custom_call.1} parent=1 // pred_check
      _
    $region43: #{tpu_custom_call.1} parent=1 // pred_check_branch
      %91 = sbr.rel (0) target = $region45
    $region44: #{tpu_custom_call.1} parent=1 // pred_region
      %92 = dma.done [#allocation6], 1024
    $region45: #{tpu_custom_call.1} parent=1 // pred_fallthru
      _
    // Predicated region
    $region46: #{tpu_custom_call.1} parent=1 // pred_check
      _
    $region47: #{tpu_custom_call.1} parent=1 // pred_check_branch
      %94 = sbr.rel (0) target = $region49
    $region48: #{tpu_custom_call.1} parent=1 // pred_region
      %95 = dma.done [#allocation6], 1024
    $region49: #{tpu_custom_call.1} parent=1 // pred_fallthru
      _
    // Predicated region
    $region50: #{tpu_custom_call.1} parent=1 // pred_check
      _
    $region51: #{tpu_custom_call.1} parent=1 // pred_check_branch
      %97 = sbr.rel (0) target = $region53
    $region52: #{tpu_custom_call.1} parent=1 // pred_region
      %98 = dma.done [#allocation9], 1024
    $region53: #{tpu_custom_call.1} parent=1 // pred_fallthru
      _
    // Predicated region
    $region54: #{tpu_custom_call.1} parent=1 // pred_check
      _
    $region55: #{tpu_custom_call.1} parent=1 // pred_check_branch
      %100 = sbr.rel (0) target = $region57
    $region56: #{tpu_custom_call.1} parent=1 // pred_region
      %101 = dma.done [#allocation9], 1024
    $region57: #{tpu_custom_call.1} parent=1 // pred_fallthru
      _
    %v103 = vld [vmem:[#allocation2] sm:$0xf]
    %v104 = vld [vmem:[#allocation5] sm:$0xf]
    %v105 = vld [vmem:[#allocation5 + $0x4] sm:$0xf]
    %v106 = vld [vmem:[#allocation5 + $0x8] sm:$0xf]
    %v107 = vld [vmem:[#allocation5 + $0xc] sm:$0xf]
    %v108 = vld [vmem:[#allocation5 + $0x10] sm:$0xf]
    %v109 = vld [vmem:[#allocation5 + $0x14] sm:$0xf]
    %v110 = vld [vmem:[#allocation5 + $0x18] sm:$0xf]
    %v111 = vld [vmem:[#allocation5 + $0x1c] sm:$0xf]
    %v112 = vld [vmem:[#allocation5 + $0x20] sm:$0xf]
    %v113 = vld [vmem:[#allocation5 + $0x24] sm:$0xf]
    %v114 = vld [vmem:[#allocation5 + $0x28] sm:$0xf]
    %v115 = vld [vmem:[#allocation5 + $0x2c] sm:$0xf]
    %v116 = vld [vmem:[#allocation5 + $0x30] sm:$0xf]
    %v117 = vld [vmem:[#allocation5 + $0x34] sm:$0xf]
    %v118 = vld [vmem:[#allocation5 + $0x38] sm:$0xf]
    %v119 = vld [vmem:[#allocation5 + $0x3c] sm:$0xf]
    %v120 = vld [vmem:[%s2] sm:$0x1]
    %v122 = vlaneseq
    %v123 = vshrl.u32 %v122, 7
    %v124 = vsub.s32 0, %v123
    %v125 = vrot.slane %v120, %v124
    %v143 = vunpack.c.l.b16 %v104
    %v144 = vunpack.c.l.b16 %v105
    %v145 = vunpack.c.l.b16 %v106
    %v146 = vunpack.c.l.b16 %v107
    %v147 = vunpack.c.l.b16 %v108
    %v148 = vunpack.c.l.b16 %v109
    %v149 = vunpack.c.l.b16 %v110
    %v150 = vunpack.c.l.b16 %v111
    %v151 = vunpack.c.l.b16 %v112
    %v152 = vunpack.c.l.b16 %v113
    %v153 = vunpack.c.l.b16 %v114
    %v154 = vunpack.c.l.b16 %v115
    %v155 = vunpack.c.l.b16 %v116
    %v156 = vunpack.c.l.b16 %v117
    %v157 = vunpack.c.l.b16 %v118
    %v158 = vunpack.c.l.b16 %v119
    %v159 = vpack.c.b16 %v144, %v143
    %v160 = vpack.c.b16 %v146, %v145
    %v161 = vpack.c.b16 %v148, %v147
    %v162 = vpack.c.b16 %v150, %v149
    %v163 = vpack.c.b16 %v152, %v151
    %v164 = vpack.c.b16 %v154, %v153
    %v165 = vpack.c.b16 %v156, %v155
    %v166 = vpack.c.b16 %v158, %v157
    %175 = vmatprep.subr.bf16.mxu0 0
    %176 = vmatpush1.bf16.msra.mxu0 %v159
    %177 = vmatprep.subr.bf16.mxu0 0
    %178 = vmatpush1.bf16.msra.mxu0 %v160
    %179 = vmatprep.subr.bf16.mxu0 0
    %180 = vmatpush1.bf16.msra.mxu0 %v161
    %181 = vmatprep.subr.bf16.mxu0 0
    %182 = vmatpush1.bf16.msra.mxu0 %v162
    %183 = vmatprep.subr.bf16.mxu0 0
    %184 = vmatpush1.bf16.msra.mxu0 %v163
    %185 = vmatprep.subr.bf16.mxu0 0
    %186 = vmatpush1.bf16.msra.mxu0 %v164
    %187 = vmatprep.subr.bf16.mxu0 0
    %188 = vmatpush1.bf16.msra.mxu0 %v165
    %189 = vmatprep.subr.bf16.mxu0 0
    %190 = vmatpush1.bf16.msra.mxu0 %v166
    %191 = vmatprep.subr.bf16.mxu0 0
    %192 = vmatpush1.bf16.msra.mxu0 0
    %193 = vmatprep.subr.bf16.mxu0 0
    %194 = vmatpush1.bf16.msra.mxu0 0
    %195 = vmatprep.subr.bf16.mxu0 0
    %196 = vmatpush1.bf16.msra.mxu0 0
    %197 = vmatprep.subr.bf16.mxu0 0
    %198 = vmatpush1.bf16.msra.mxu0 0
    %199 = vmatprep.subr.bf16.mxu0 0
    %200 = vmatpush1.bf16.msra.mxu0 0
    %201 = vmatprep.subr.bf16.mxu0 0
    %202 = vmatpush1.bf16.msra.mxu0 0
    %203 = vmatprep.subr.bf16.mxu0 0
    %204 = vmatpush1.bf16.msra.mxu0 0
    %205 = vmatprep.subr.bf16.mxu0 0
    %206 = vmatpush1.bf16.msra.mxu0 0
    %207 = vmatprep.mubr.bf16.mxu0 0
    %208 = vmatmul.mubr.bf16.gmra.mrb[0].mxu0 %v103
    %v209 = vpop.f32.mrb[0].mxu0
    %v210 = vadd.f32 %v125, %v209
    %v211 = vpop.f32.mrb[0].mxu0
    %v212 = vpop.f32.mrb[0].mxu0
    %v213 = vpop.f32.mrb[0].mxu0
    %214 = vdwg.mxu0
    %v215 = vmax.f32 %v210, 0.0
    %v216 = vpack.c.bf16 %v215, %v215
    %v217 = vld [vmem:[#allocation7] sm:$0xf]
    %v218 = vld [vmem:[#allocation7 + $0x4] sm:$0xf]
    %v219 = vld [vmem:[#allocation7 + $0x8] sm:$0xf]
    %v220 = vld [vmem:[#allocation7 + $0xc] sm:$0xf]
    %v221 = vld [vmem:[#allocation7 + $0x10] sm:$0xf]
    %v222 = vld [vmem:[#allocation7 + $0x14] sm:$0xf]
    %v223 = vld [vmem:[#allocation7 + $0x18] sm:$0xf]
    %v224 = vld [vmem:[#allocation7 + $0x1c] sm:$0xf]
    %v225 = vld [vmem:[#allocation7 + $0x20] sm:$0xf]
    %v226 = vld [vmem:[#allocation7 + $0x24] sm:$0xf]
    %v227 = vld [vmem:[#allocation7 + $0x28] sm:$0xf]
    %v228 = vld [vmem:[#allocation7 + $0x2c] sm:$0xf]
    %v229 = vld [vmem:[#allocation7 + $0x30] sm:$0xf]
    %v230 = vld [vmem:[#allocation7 + $0x34] sm:$0xf]
    %v231 = vld [vmem:[#allocation7 + $0x38] sm:$0xf]
    %v232 = vld [vmem:[#allocation7 + $0x3c] sm:$0xf]
    %v233 = vld [vmem:[%s4] sm:$0x1]
    %v235 = vlaneseq
    %v236 = vshrl.u32 %v235, 7
    %v237 = vsub.s32 0, %v236
    %v238 = vrot.slane %v233, %v237
    %v256 = vunpack.c.l.b16 %v217
    %v257 = vunpack.c.l.b16 %v218
    %v258 = vunpack.c.l.b16 %v219
    %v259 = vunpack.c.l.b16 %v220
    %v260 = vunpack.c.l.b16 %v221
    %v261 = vunpack.c.l.b16 %v222
    %v262 = vunpack.c.l.b16 %v223
    %v263 = vunpack.c.l.b16 %v224
    %v264 = vunpack.c.l.b16 %v225
    %v265 = vunpack.c.l.b16 %v226
    %v266 = vunpack.c.l.b16 %v227
    %v267 = vunpack.c.l.b16 %v228
    %v268 = vunpack.c.l.b16 %v229
    %v269 = vunpack.c.l.b16 %v230
    %v270 = vunpack.c.l.b16 %v231
    %v271 = vunpack.c.l.b16 %v232
    %v272 = vpack.c.b16 %v257, %v256
    %v273 = vpack.c.b16 %v259, %v258
    %v274 = vpack.c.b16 %v261, %v260
    %v275 = vpack.c.b16 %v263, %v262
    %v276 = vpack.c.b16 %v265, %v264
    %v277 = vpack.c.b16 %v267, %v266
    %v278 = vpack.c.b16 %v269, %v268
    %v279 = vpack.c.b16 %v271, %v270
    %288 = vmatprep.subr.bf16.mxu0 0
    %289 = vmatpush1.bf16.msra.mxu0 %v272
    %290 = vmatprep.subr.bf16.mxu0 0
    %291 = vmatpush1.bf16.msra.mxu0 %v273
    %292 = vmatprep.subr.bf16.mxu0 0
    %293 = vmatpush1.bf16.msra.mxu0 %v274
    %294 = vmatprep.subr.bf16.mxu0 0
    %295 = vmatpush1.bf16.msra.mxu0 %v275
    %296 = vmatprep.subr.bf16.mxu0 0
    %297 = vmatpush1.bf16.msra.mxu0 %v276
    %298 = vmatprep.subr.bf16.mxu0 0
    %299 = vmatpush1.bf16.msra.mxu0 %v277
    %300 = vmatprep.subr.bf16.mxu0 0
    %301 = vmatpush1.bf16.msra.mxu0 %v278
    %302 = vmatprep.subr.bf16.mxu0 0
    %303 = vmatpush1.bf16.msra.mxu0 %v279
    %304 = vmatprep.subr.bf16.mxu0 0
    %305 = vmatpush1.bf16.msra.mxu0 0
    %306 = vmatprep.subr.bf16.mxu0 0
    %307 = vmatpush1.bf16.msra.mxu0 0
    %308 = vmatprep.subr.bf16.mxu0 0
    %309 = vmatpush1.bf16.msra.mxu0 0
    %310 = vmatprep.subr.bf16.mxu0 0
    %311 = vmatpush1.bf16.msra.mxu0 0
    %312 = vmatprep.subr.bf16.mxu0 0
    %313 = vmatpush1.bf16.msra.mxu0 0
    %314 = vmatprep.subr.bf16.mxu0 0
    %315 = vmatpush1.bf16.msra.mxu0 0
    %316 = vmatprep.subr.bf16.mxu0 0
    %317 = vmatpush1.bf16.msra.mxu0 0
    %318 = vmatprep.subr.bf16.mxu0 0
    %319 = vmatpush1.bf16.msra.mxu0 0
    %320 = vmatprep.mubr.bf16.mxu0 0
    %321 = vmatmul.mubr.bf16.gmra.mrb[0].mxu0 %v216
    %v322 = vpop.f32.mrb[0].mxu0
    %v323 = vadd.f32 %v238, %v322
    %v324 = vpop.f32.mrb[0].mxu0
    %v325 = vpop.f32.mrb[0].mxu0
    %v326 = vpop.f32.mrb[0].mxu0
    %327 = vdwg.mxu0
    %v328 = vmax.f32 %v323, 0.0
    %v329 = vpack.c.bf16 %v328, %v328
    %v330 = vld [vmem:[#allocation8] sm:$0xf]
    %v331 = vld [vmem:[#allocation8 + $0x4] sm:$0xf]
    %v332 = vld [vmem:[#allocation8 + $0x8] sm:$0xf]
    %v333 = vld [vmem:[#allocation8 + $0xc] sm:$0xf]
    %v334 = vld [vmem:[#allocation8 + $0x10] sm:$0xf]
    %v335 = vld [vmem:[#allocation8 + $0x14] sm:$0xf]
    %v336 = vld [vmem:[#allocation8 + $0x18] sm:$0xf]
    %v337 = vld [vmem:[#allocation8 + $0x1c] sm:$0xf]
    %v338 = vld [vmem:[#allocation8 + $0x20] sm:$0xf]
    %v339 = vld [vmem:[#allocation8 + $0x24] sm:$0xf]
    %v340 = vld [vmem:[#allocation8 + $0x28] sm:$0xf]
    %v341 = vld [vmem:[#allocation8 + $0x2c] sm:$0xf]
    %v342 = vld [vmem:[#allocation8 + $0x30] sm:$0xf]
    %v343 = vld [vmem:[#allocation8 + $0x34] sm:$0xf]
    %v344 = vld [vmem:[#allocation8 + $0x38] sm:$0xf]
    %v345 = vld [vmem:[#allocation8 + $0x3c] sm:$0xf]
    %v346 = vld [vmem:[%s6] sm:$0x1]
    %v348 = vlaneseq
    %v349 = vshrl.u32 %v348, 7
    %v350 = vsub.s32 0, %v349
    %v351 = vrot.slane %v346, %v350
    %v369 = vunpack.c.l.b16 %v330
    %v370 = vunpack.c.l.b16 %v331
    %v371 = vunpack.c.l.b16 %v332
    %v372 = vunpack.c.l.b16 %v333
    %v373 = vunpack.c.l.b16 %v334
    %v374 = vunpack.c.l.b16 %v335
    %v375 = vunpack.c.l.b16 %v336
    %v376 = vunpack.c.l.b16 %v337
    %v377 = vunpack.c.l.b16 %v338
    %v378 = vunpack.c.l.b16 %v339
    %v379 = vunpack.c.l.b16 %v340
    %v380 = vunpack.c.l.b16 %v341
    %v381 = vunpack.c.l.b16 %v342
    %v382 = vunpack.c.l.b16 %v343
    %v383 = vunpack.c.l.b16 %v344
    %v384 = vunpack.c.l.b16 %v345
    %v385 = vpack.c.b16 %v370, %v369
    %v386 = vpack.c.b16 %v372, %v371
    %v387 = vpack.c.b16 %v374, %v373
    %v388 = vpack.c.b16 %v376, %v375
    %v389 = vpack.c.b16 %v378, %v377
    %v390 = vpack.c.b16 %v380, %v379
    %v391 = vpack.c.b16 %v382, %v381
    %v392 = vpack.c.b16 %v384, %v383
    %401 = vmatprep.subr.bf16.mxu0 0
    %402 = vmatpush1.bf16.msra.mxu0 %v385
    %403 = vmatprep.subr.bf16.mxu0 0
    %404 = vmatpush1.bf16.msra.mxu0 %v386
    %405 = vmatprep.subr.bf16.mxu0 0
    %406 = vmatpush1.bf16.msra.mxu0 %v387
    %407 = vmatprep.subr.bf16.mxu0 0
    %408 = vmatpush1.bf16.msra.mxu0 %v388
    %409 = vmatprep.subr.bf16.mxu0 0
    %410 = vmatpush1.bf16.msra.mxu0 %v389
    %411 = vmatprep.subr.bf16.mxu0 0
    %412 = vmatpush1.bf16.msra.mxu0 %v390
    %413 = vmatprep.subr.bf16.mxu0 0
    %414 = vmatpush1.bf16.msra.mxu0 %v391
    %415 = vmatprep.subr.bf16.mxu0 0
    %416 = vmatpush1.bf16.msra.mxu0 %v392
    %417 = vmatprep.subr.bf16.mxu0 0
    %418 = vmatpush1.bf16.msra.mxu0 0
    %419 = vmatprep.subr.bf16.mxu0 0
    %420 = vmatpush1.bf16.msra.mxu0 0
    %421 = vmatprep.subr.bf16.mxu0 0
    %422 = vmatpush1.bf16.msra.mxu0 0
    %423 = vmatprep.subr.bf16.mxu0 0
    %424 = vmatpush1.bf16.msra.mxu0 0
    %425 = vmatprep.subr.bf16.mxu0 0
    %426 = vmatpush1.bf16.msra.mxu0 0
    %427 = vmatprep.subr.bf16.mxu0 0
    %428 = vmatpush1.bf16.msra.mxu0 0
    %429 = vmatprep.subr.bf16.mxu0 0
    %430 = vmatpush1.bf16.msra.mxu0 0
    %431 = vmatprep.subr.bf16.mxu0 0
    %432 = vmatpush1.bf16.msra.mxu0 0
    %433 = vmatprep.mubr.bf16.mxu0 0
    %434 = vmatmul.mubr.bf16.gmra.mrb[0].mxu0 %v329
    %v435 = vpop.f32.mrb[0].mxu0
    %v436 = vadd.f32 %v351, %v435
    %v437 = vpop.f32.mrb[0].mxu0
    %v438 = vpop.f32.mrb[0].mxu0
    %v439 = vpop.f32.mrb[0].mxu0
    %440 = vdwg.mxu0
    %441 = vst [vmem:[#allocation11] sm:$0xff] %v436
    %v442 = vld [vmem:[#allocation10] sm:$0xf]
    %v443 = vld [vmem:[#allocation10 + $0x4] sm:$0xf]
    %v444 = vld [vmem:[#allocation10 + $0x8] sm:$0xf]
    %v445 = vld [vmem:[#allocation10 + $0xc] sm:$0xf]
    %v446 = vld [vmem:[#allocation10 + $0x10] sm:$0xf]
    %v447 = vld [vmem:[#allocation10 + $0x14] sm:$0xf]
    %v448 = vld [vmem:[#allocation10 + $0x18] sm:$0xf]
    %v449 = vld [vmem:[#allocation10 + $0x1c] sm:$0xf]
    %v450 = vld [vmem:[#allocation10 + $0x20] sm:$0xf]
    %v451 = vld [vmem:[#allocation10 + $0x24] sm:$0xf]
    %v452 = vld [vmem:[#allocation10 + $0x28] sm:$0xf]
    %v453 = vld [vmem:[#allocation10 + $0x2c] sm:$0xf]
    %v454 = vld [vmem:[#allocation10 + $0x30] sm:$0xf]
    %v455 = vld [vmem:[#allocation10 + $0x34] sm:$0xf]
    %v456 = vld [vmem:[#allocation10 + $0x38] sm:$0xf]
    %v457 = vld [vmem:[#allocation10 + $0x3c] sm:$0xf]
    %v458 = vld [vmem:[%s8] sm:$0x1]
    %v460 = vlaneseq
    %v461 = vshrl.u32 %v460, 7
    %v462 = vsub.s32 0, %v461
    %v463 = vrot.slane %v458, %v462
    %v481 = vunpack.c.l.b16 %v442
    %v482 = vunpack.c.l.b16 %v443
    %v483 = vunpack.c.l.b16 %v444
    %v484 = vunpack.c.l.b16 %v445
    %v485 = vunpack.c.l.b16 %v446
    %v486 = vunpack.c.l.b16 %v447
    %v487 = vunpack.c.l.b16 %v448
    %v488 = vunpack.c.l.b16 %v449
    %v489 = vunpack.c.l.b16 %v450
    %v490 = vunpack.c.l.b16 %v451
    %v491 = vunpack.c.l.b16 %v452
    %v492 = vunpack.c.l.b16 %v453
    %v493 = vunpack.c.l.b16 %v454
    %v494 = vunpack.c.l.b16 %v455
    %v495 = vunpack.c.l.b16 %v456
    %v496 = vunpack.c.l.b16 %v457
    %v497 = vpack.c.b16 %v482, %v481
    %v498 = vpack.c.b16 %v484, %v483
    %v499 = vpack.c.b16 %v486, %v485
    %v500 = vpack.c.b16 %v488, %v487
    %v501 = vpack.c.b16 %v490, %v489
    %v502 = vpack.c.b16 %v492, %v491
    %v503 = vpack.c.b16 %v494, %v493
    %v504 = vpack.c.b16 %v496, %v495
    %513 = vmatprep.subr.bf16.mxu0 0
    %514 = vmatpush1.bf16.msra.mxu0 %v497
    %515 = vmatprep.subr.bf16.mxu0 0
    %516 = vmatpush1.bf16.msra.mxu0 %v498
    %517 = vmatprep.subr.bf16.mxu0 0
    %518 = vmatpush1.bf16.msra.mxu0 %v499
    %519 = vmatprep.subr.bf16.mxu0 0
    %520 = vmatpush1.bf16.msra.mxu0 %v500
    %521 = vmatprep.subr.bf16.mxu0 0
    %522 = vmatpush1.bf16.msra.mxu0 %v501
    %523 = vmatprep.subr.bf16.mxu0 0
    %524 = vmatpush1.bf16.msra.mxu0 %v502
    %525 = vmatprep.subr.bf16.mxu0 0
    %526 = vmatpush1.bf16.msra.mxu0 %v503
    %527 = vmatprep.subr.bf16.mxu0 0
    %528 = vmatpush1.bf16.msra.mxu0 %v504
    %529 = vmatprep.subr.bf16.mxu0 0
    %530 = vmatpush1.bf16.msra.mxu0 0
    %531 = vmatprep.subr.bf16.mxu0 0
    %532 = vmatpush1.bf16.msra.mxu0 0
    %533 = vmatprep.subr.bf16.mxu0 0
    %534 = vmatpush1.bf16.msra.mxu0 0
    %535 = vmatprep.subr.bf16.mxu0 0
    %536 = vmatpush1.bf16.msra.mxu0 0
    %537 = vmatprep.subr.bf16.mxu0 0
    %538 = vmatpush1.bf16.msra.mxu0 0
    %539 = vmatprep.subr.bf16.mxu0 0
    %540 = vmatpush1.bf16.msra.mxu0 0
    %541 = vmatprep.subr.bf16.mxu0 0
    %542 = vmatpush1.bf16.msra.mxu0 0
    %543 = vmatprep.subr.bf16.mxu0 0
    %544 = vmatpush1.bf16.msra.mxu0 0
    %545 = vmatprep.mubr.bf16.mxu0 0
    %546 = vmatmul.mubr.bf16.gmra.mrb[0].mxu0 %v329
    %v547 = vpop.f32.mrb[0].mxu0
    %v548 = vadd.f32 %v463, %v547
    %v549 = vpop.f32.mrb[0].mxu0
    %v550 = vpop.f32.mrb[0].mxu0
    %v551 = vpop.f32.mrb[0].mxu0
    %552 = vdwg.mxu0
    %553 = vst [vmem:[#allocation12] sm:$0xff] %v548
    // Predicated region
    $region58: #{tpu_custom_call.1} parent=1 // pred_check
      _
    $region59: #{tpu_custom_call.1} parent=1 // pred_check_branch
      %555 = sbr.rel (0) target = $region61
    $region60: #{tpu_custom_call.1} parent=1 // pred_region
      %s557 = ssub.s32 128, 128
      %558 = vsyncadd [#allocation4], %s557
      %s560 = sshll.u32 [#allocation11], 4
      %s561 = int_to_ptr.vmem [resolvable:$true] %s560
      %563 = dma.vmem_to_hbm [thread:$0]  %s561, 128, %s9, [#allocation4]
    $region61: #{tpu_custom_call.1} parent=1 // pred_fallthru
      _
    // Predicated region
    $region62: #{tpu_custom_call.1} parent=1 // pred_check
      _
    $region63: #{tpu_custom_call.1} parent=1 // pred_check_branch
      %565 = sbr.rel (0) target = $region65
    $region64: #{tpu_custom_call.1} parent=1 // pred_region
      %s567 = ssub.s32 128, 128
      %568 = vsyncadd [#allocation13], %s567
      %s570 = sshll.u32 [#allocation12], 4
      %s571 = int_to_ptr.vmem [resolvable:$true] %s570
      %573 = dma.vmem_to_hbm [thread:$0]  %s571, 128, %s10, [#allocation13]
    $region65: #{tpu_custom_call.1} parent=1 // pred_fallthru
      _
    // Predicated region
    $region66: #{tpu_custom_call.1} parent=1 // pred_check
      _
    $region67: #{tpu_custom_call.1} parent=1 // pred_check_branch
      %575 = sbr.rel (0) target = $region69
    $region68: #{tpu_custom_call.1} parent=1 // pred_region
      %576 = dma.done [#allocation4], 128
    $region69: #{tpu_custom_call.1} parent=1 // pred_fallthru
      _
    // Predicated region
    $region70: #{tpu_custom_call.1} parent=1 // pred_check
      _
    $region71: #{tpu_custom_call.1} parent=1 // pred_check_branch
      %578 = sbr.rel (0) target = $region73
    $region72: #{tpu_custom_call.1} parent=1 // pred_region
      %579 = dma.done [#allocation13], 128
    $region73: #{tpu_custom_call.1} parent=1 // pred_fallthru
      _
    %580 = vsyncpa [#allocation3], 1
    %581 = vsyncpa [#allocation6], 1
    %582 = vsyncpa [#allocation9], 1
    %583 = vsyncpa [#allocation4], 1
    %584 = vsyncpa [#allocation13], 1

</llo_original>
